<compile_context>
chip_gen: v5e
topology: v5e:2x2
jax: 0.10.0
libtpu: 0.0.40
codegen_flags: <defaults>
</compile_context>

<pallas_src>
import functools

import jax
import jax.numpy as jnp
from jax import lax
from jax.experimental import pallas as pl
from jax.experimental.pallas import tpu as pltpu

GAMMA = 2.0  # FocalLossMutiClass default; hard-coded as (1-p)^2 in the kernel
FOCAL_WEIGHTS = (0.145, 0.1796, 0.3762, 0.2992)

_LANE = 128            # lane width
_SUB = 8               # sublane count (f32)
_ALIGN = _SUB * _LANE  # 1024-pixel alignment (only pad when HW % 1024 != 0)
_MAX_ROW_BLOCK = 1024  # rows of 128 px per tile -> 2 MiB f32 logits tile (C=4)


def _focal_kernel(x_ref, t_ref, o_ref, *, class_weights, num_classes,
                  total_rows, onehot):
    """One grid step = one (batch, hw-tile) block.

    x_ref : (1, C, r_blk, 128)  logits, native dtype
    t_ref : (1, r_blk, 128)     int32 class indices        (onehot=False)
            (1, C, r_blk, 128)  one-hot target, any dtype  (onehot=True)
    o_ref : (1, 1, 8, 128)      per-block partial focal-loss sums (f32)
    """
    r_blk = x_ref.shape[2]

    # Running max over class slabs; per-slab cast avoids materializing a full
    # (C, r_blk, 128) f32 temp that would be stored and reloaded.
    m = x_ref[0, 0].astype(jnp.float32)
    for c in range(1, num_classes):
        m = jnp.maximum(m, x_ref[0, c].astype(jnp.float32))

    e_sum = jnp.zeros_like(m)
    shifted_t = jnp.zeros_like(m)
    w_t = jnp.zeros_like(m)
    if onehot:
        for c in range(num_classes):
            s_c = x_ref[0, c].astype(jnp.float32) - m
            e_sum = e_sum + jnp.exp(s_c)
            t_c = t_ref[0, c].astype(jnp.float32)
            shifted_t = shifted_t + t_c * s_c
            w_t = w_t + t_c * class_weights[c]
    else:
        idx = t_ref[0]
        for c in range(num_classes):
            s_c = x_ref[0, c].astype(jnp.float32) - m
            e_sum = e_sum + jnp.exp(s_c)
            sel = idx == c
            shifted_t = jnp.where(sel, s_c, shifted_t)
            w_t = jnp.where(sel, class_weights[c], w_t)
    # Out-of-range labels / all-zero one-hot rows keep w_t == 0 -> zero loss.

    logp_t = shifted_t - jnp.log(e_sum)      # stable log-softmax of true class
    p_t = jnp.exp(logp_t)                    # extra EUP exp; no selects / divide
    one_minus = 1.0 - p_t
    focal = -w_t * one_minus * one_minus * logp_t     # gamma = 2

    if total_rows % r_blk != 0:
        # Ragged last tile: rows past the array end hold garbage; zero them.
        row0 = pl.program_id(1) * r_blk
        rows = row0 + lax.broadcasted_iota(jnp.int32, focal.shape, 0)
        focal = jnp.where(rows < total_rows, focal, 0.0)

    # (r_blk, 128) -> (8, 128) partial sums (tile-aligned reshape, VPU adds);
    # the final mean happens in XLA (better f32 accumulation too).
    o_ref[0, 0] = jnp.sum(focal.reshape(r_blk // _SUB, _SUB, _LANE), axis=0)


def _pick_tiles(rows, n):
    """Pick r_blk (multiple of 8, <= rows) and num_tiles, aiming for >= 8 grid
    steps so v7x's two TensorCores get a balanced split."""
    min_tiles = max(1, pl.cdiv(8, n))
    desired = pl.cdiv(pl.cdiv(rows, min_tiles), _SUB) * _SUB
    r_blk = min(_MAX_ROW_BLOCK, max(_SUB, desired), rows)
    return r_blk, pl.cdiv(rows, r_blk)


def _pad_and_fold(flat, hw, pad_value):
    """(..., HW) -> (..., rows, 128) with rows a multiple of 8.

    Padding (a single XLA copy) only happens when HW is not a multiple of 1024
    pixels; aligned shapes are folded with a free (bitcast) reshape.
    """
    hw_pad = pl.cdiv(hw, _ALIGN) * _ALIGN
    if hw_pad != hw:
        # TODO(synk): this tail pad still costs one XLA copy pass; only hit
        # when H*W is not a multiple of 1024 pixels.
        widths = [(0, 0)] * (flat.ndim - 1) + [(0, hw_pad - hw)]
        flat = jnp.pad(flat, widths, constant_values=pad_value)
    rows = hw_pad // _LANE
    return flat.reshape(flat.shape[:-1] + (rows, _LANE)), rows


def _pallas_focal(x4, t4, *, n, c, rows, r_blk, num_tiles, n_px, onehot):
    kernel = functools.partial(
        _focal_kernel, class_weights=FOCAL_WEIGHTS, num_classes=c,
        total_rows=rows, onehot=onehot)

    if onehot:
        t_spec = pl.BlockSpec((1, c, r_blk, _LANE), lambda b, t: (b, 0, t, 0))
    else:
        t_spec = pl.BlockSpec((1, r_blk, _LANE), lambda b, t: (b, t, 0))

    out_bytes = n * num_tiles * _SUB * _LANE * 4
    cost = pl.CostEstimate(
        flops=int(30 * n_px),
        transcendentals=int(6 * n_px),
        bytes_accessed=int(x4.size * x4.dtype.itemsize
                           + t4.size * t4.dtype.itemsize + out_bytes))

    partials = pl.pallas_call(
        kernel,
        out_shape=jax.ShapeDtypeStruct((n, num_tiles, _SUB, _LANE), jnp.float32),
        grid_spec=pltpu.PrefetchScalarGridSpec(
            num_scalar_prefetch=0,
            grid=(n, num_tiles),
            in_specs=[
                pl.BlockSpec((1, c, r_blk, _LANE), lambda b, t: (b, 0, t, 0)),
                t_spec,
            ],
            out_specs=pl.BlockSpec((1, 1, _SUB, _LANE),
                                   lambda b, t: (b, t, 0, 0)),
        ),
        compiler_params=pltpu.CompilerParams(
            dimension_semantics=("parallel", "parallel")),
        cost_estimate=cost,
    )(x4, t4)

    # Mean over the original (unpadded) N*H*W pixels.
    return jnp.sum(partials) / jnp.float32(n_px)


def mixed_loss_from_indices(logits_nchw, class_idx_nhw):
    """Fast entry: logits (N,C,H,W), target = integer class indices (N,H,W)."""
    N, C, H, W = logits_nchw.shape
    assert C == len(FOCAL_WEIGHTS), "MixedLoss hard-codes 4 class weights"
    HW = H * W

    x, rows = _pad_and_fold(logits_nchw.reshape(N, C, HW), HW, 0)
    idx, _ = _pad_and_fold(class_idx_nhw.reshape(N, HW).astype(jnp.int32), HW, C)
    r_blk, num_tiles = _pick_tiles(rows, N)

    return _pallas_focal(x, idx, n=N, c=C, rows=rows, r_blk=r_blk,
                         num_tiles=num_tiles, n_px=N * HW, onehot=False)


def mixed_loss(logits_nchw, target, weights=None):
    """Module-faithful entry: target is a (hard) one-hot tensor (N,C,H,W);
    integer class indices (N,H,W) are also accepted. `weights` is ignored,
    exactly like the PyTorch module."""
    del weights
    if target.ndim == 3:
        return mixed_loss_from_indices(logits_nchw, target)

    N, C, H, W = logits_nchw.shape
    assert C == len(FOCAL_WEIGHTS), "MixedLoss hard-codes 4 class weights"
    HW = H * W

    # One-hot path is fused into the kernel (no wrapper-side argmax pass).
    x, rows = _pad_and_fold(logits_nchw.reshape(N, C, HW), HW, 0)
    t, _ = _pad_and_fold(target.reshape(N, C, HW), HW, 0)
    r_blk, num_tiles = _pick_tiles(rows, N)

    return _pallas_focal(x, t, n=N, c=C, rows=rows, r_blk=r_blk,
                         num_tiles=num_tiles, n_px=N * HW, onehot=True)


def _reference(logits, target_onehot):
    """Pure-JAX reference (weighted multi-class focal loss, gamma=2, mean)."""
    w = jnp.array(FOCAL_WEIGHTS, dtype=jnp.float32)
    logp = jax.nn.log_softmax(logits.astype(jnp.float32), axis=1)
    logp_t = jnp.sum(target_onehot * logp, axis=1)              # (N, H, W)
    p_t = jnp.exp(logp_t)
    w_t = jnp.sum(target_onehot * w[None, :, None, None], axis=1)
    focal = -w_t * (1.0 - p_t) ** GAMMA * logp_t
    return jnp.mean(focal)


if __name__ == "__main__":
    key = jax.random.PRNGKey(0)
    N, C, H, W = 2, 4, 16, 16
    k_x, k_t = jax.random.split(key)

    logits = jax.random.normal(k_x, (N, C, H, W), dtype=jnp.float32)
    cls = jax.random.randint(k_t, (N, H, W), 0, C, dtype=jnp.int32)
    target = jax.nn.one_hot(cls, C, axis=1, dtype=jnp.float32)   # (N, C, H, W)

    loss_oh = jax.block_until_ready(mixed_loss(logits, target))
    loss_idx = jax.block_until_ready(mixed_loss_from_indices(logits, cls))
    ref = jax.block_until_ready(_reference(logits, target))

    assert jnp.allclose(loss_oh, ref, rtol=1e-5, atol=1e-6), (loss_oh, ref)
    assert jnp.allclose(loss_idx, ref, rtol=1e-5, atol=1e-6), (loss_idx, ref)
    print("KERNEL_OK")
</pallas_src>

<mosaic_0001>
module attributes {stable_mosaic.version = 11 : i64} {
  func.func @_focal_kernel(%arg0: i32, %arg1: i32, %arg2: memref<1x4x8x128xf32, #tpu.memory_space<vmem>>, %arg3: memref<1x4x8x128xf32, #tpu.memory_space<vmem>>, %arg4: memref<1x1x8x128xf32, #tpu.memory_space<vmem>>) attributes {dimension_semantics = [#tpu.dimension_semantics<parallel>, #tpu.dimension_semantics<parallel>], iteration_bounds = array<i64: 2, 1>, scalar_prefetch = 0 : i64, scratch_operands = 0 : i64, tpu.core_type = #tpu.core_type<tc>, window_params = [{transform_indices = @transform_0, window_bounds = array<i64: 1, 4, 8, 128>}, {transform_indices = @transform_1, window_bounds = array<i64: 1, 4, 8, 128>}, {transform_indices = @transform_2, window_bounds = array<i64: 1, 1, 8, 128>}]} {
    %c0 = arith.constant 0 : index
    %c0_0 = arith.constant 0 : index
    %c0_1 = arith.constant 0 : index
    %c0_2 = arith.constant 0 : index
    %0 = vector.load %arg2[%c0, %c0_0, %c0_1, %c0_2] : memref<1x4x8x128xf32, #tpu.memory_space<vmem>>, vector<1x1x8x128xf32>
    %1 = vector.shape_cast %0 : vector<1x1x8x128xf32> to vector<8x128xf32>
    %c0_3 = arith.constant 0 : index
    %c1 = arith.constant 1 : index
    %c0_4 = arith.constant 0 : index
    %c0_5 = arith.constant 0 : index
    %2 = vector.load %arg2[%c0_3, %c1, %c0_4, %c0_5] : memref<1x4x8x128xf32, #tpu.memory_space<vmem>>, vector<1x1x8x128xf32>
    %3 = vector.shape_cast %2 : vector<1x1x8x128xf32> to vector<8x128xf32>
    %4 = arith.maximumf %1, %3 : vector<8x128xf32>
    %c0_6 = arith.constant 0 : index
    %c2 = arith.constant 2 : index
    %c0_7 = arith.constant 0 : index
    %c0_8 = arith.constant 0 : index
    %5 = vector.load %arg2[%c0_6, %c2, %c0_7, %c0_8] : memref<1x4x8x128xf32, #tpu.memory_space<vmem>>, vector<1x1x8x128xf32>
    %6 = vector.shape_cast %5 : vector<1x1x8x128xf32> to vector<8x128xf32>
    %7 = arith.maximumf %4, %6 : vector<8x128xf32>
    %c0_9 = arith.constant 0 : index
    %c3 = arith.constant 3 : index
    %c0_10 = arith.constant 0 : index
    %c0_11 = arith.constant 0 : index
    %8 = vector.load %arg2[%c0_9, %c3, %c0_10, %c0_11] : memref<1x4x8x128xf32, #tpu.memory_space<vmem>>, vector<1x1x8x128xf32>
    %9 = vector.shape_cast %8 : vector<1x1x8x128xf32> to vector<8x128xf32>
    %10 = arith.maximumf %7, %9 : vector<8x128xf32>
    %cst = arith.constant 0.000000e+00 : f32
    %11 = vector.broadcast %cst : f32 to vector<8x128xf32>
    %cst_12 = arith.constant 0.000000e+00 : f32
    %12 = vector.broadcast %cst_12 : f32 to vector<8x128xf32>
    %cst_13 = arith.constant 0.000000e+00 : f32
    %13 = vector.broadcast %cst_13 : f32 to vector<8x128xf32>
    %c0_14 = arith.constant 0 : index
    %c0_15 = arith.constant 0 : index
    %c0_16 = arith.constant 0 : index
    %c0_17 = arith.constant 0 : index
    %14 = vector.load %arg2[%c0_14, %c0_15, %c0_16, %c0_17] : memref<1x4x8x128xf32, #tpu.memory_space<vmem>>, vector<1x1x8x128xf32>
    %15 = vector.shape_cast %14 : vector<1x1x8x128xf32> to vector<8x128xf32>
    %16 = arith.subf %15, %10 : vector<8x128xf32>
    %17 = math.exp %16 : vector<8x128xf32>
    %18 = arith.addf %11, %17 : vector<8x128xf32>
    %c0_18 = arith.constant 0 : index
    %c0_19 = arith.constant 0 : index
    %c0_20 = arith.constant 0 : index
    %c0_21 = arith.constant 0 : index
    %19 = vector.load %arg3[%c0_18, %c0_19, %c0_20, %c0_21] : memref<1x4x8x128xf32, #tpu.memory_space<vmem>>, vector<1x1x8x128xf32>
    %20 = vector.shape_cast %19 : vector<1x1x8x128xf32> to vector<8x128xf32>
    %21 = arith.mulf %20, %16 : vector<8x128xf32>
    %22 = arith.addf %12, %21 : vector<8x128xf32>
    %cst_22 = arith.constant 1.450000e-01 : f32
    %23 = vector.broadcast %cst_22 : f32 to vector<8x128xf32>
    %24 = arith.mulf %20, %23 : vector<8x128xf32>
    %25 = arith.addf %13, %24 : vector<8x128xf32>
    %c0_23 = arith.constant 0 : index
    %c1_24 = arith.constant 1 : index
    %c0_25 = arith.constant 0 : index
    %c0_26 = arith.constant 0 : index
    %26 = vector.load %arg2[%c0_23, %c1_24, %c0_25, %c0_26] : memref<1x4x8x128xf32, #tpu.memory_space<vmem>>, vector<1x1x8x128xf32>
    %27 = vector.shape_cast %26 : vector<1x1x8x128xf32> to vector<8x128xf32>
    %28 = arith.subf %27, %10 : vector<8x128xf32>
    %29 = math.exp %28 : vector<8x128xf32>
    %30 = arith.addf %18, %29 : vector<8x128xf32>
    %c0_27 = arith.constant 0 : index
    %c1_28 = arith.constant 1 : index
    %c0_29 = arith.constant 0 : index
    %c0_30 = arith.constant 0 : index
    %31 = vector.load %arg3[%c0_27, %c1_28, %c0_29, %c0_30] : memref<1x4x8x128xf32, #tpu.memory_space<vmem>>, vector<1x1x8x128xf32>
    %32 = vector.shape_cast %31 : vector<1x1x8x128xf32> to vector<8x128xf32>
    %33 = arith.mulf %32, %28 : vector<8x128xf32>
    %34 = arith.addf %22, %33 : vector<8x128xf32>
    %cst_31 = arith.constant 1.796000e-01 : f32
    %35 = vector.broadcast %cst_31 : f32 to vector<8x128xf32>
    %36 = arith.mulf %32, %35 : vector<8x128xf32>
    %37 = arith.addf %25, %36 : vector<8x128xf32>
    %c0_32 = arith.constant 0 : index
    %c2_33 = arith.constant 2 : index
    %c0_34 = arith.constant 0 : index
    %c0_35 = arith.constant 0 : index
    %38 = vector.load %arg2[%c0_32, %c2_33, %c0_34, %c0_35] : memref<1x4x8x128xf32, #tpu.memory_space<vmem>>, vector<1x1x8x128xf32>
    %39 = vector.shape_cast %38 : vector<1x1x8x128xf32> to vector<8x128xf32>
    %40 = arith.subf %39, %10 : vector<8x128xf32>
    %41 = math.exp %40 : vector<8x128xf32>
    %42 = arith.addf %30, %41 : vector<8x128xf32>
    %c0_36 = arith.constant 0 : index
    %c2_37 = arith.constant 2 : index
    %c0_38 = arith.constant 0 : index
    %c0_39 = arith.constant 0 : index
    %43 = vector.load %arg3[%c0_36, %c2_37, %c0_38, %c0_39] : memref<1x4x8x128xf32, #tpu.memory_space<vmem>>, vector<1x1x8x128xf32>
    %44 = vector.shape_cast %43 : vector<1x1x8x128xf32> to vector<8x128xf32>
    %45 = arith.mulf %44, %40 : vector<8x128xf32>
    %46 = arith.addf %34, %45 : vector<8x128xf32>
    %cst_40 = arith.constant 3.762000e-01 : f32
    %47 = vector.broadcast %cst_40 : f32 to vector<8x128xf32>
    %48 = arith.mulf %44, %47 : vector<8x128xf32>
    %49 = arith.addf %37, %48 : vector<8x128xf32>
    %c0_41 = arith.constant 0 : index
    %c3_42 = arith.constant 3 : index
    %c0_43 = arith.constant 0 : index
    %c0_44 = arith.constant 0 : index
    %50 = vector.load %arg2[%c0_41, %c3_42, %c0_43, %c0_44] : memref<1x4x8x128xf32, #tpu.memory_space<vmem>>, vector<1x1x8x128xf32>
    %51 = vector.shape_cast %50 : vector<1x1x8x128xf32> to vector<8x128xf32>
    %52 = arith.subf %51, %10 : vector<8x128xf32>
    %53 = math.exp %52 : vector<8x128xf32>
    %54 = arith.addf %42, %53 : vector<8x128xf32>
    %c0_45 = arith.constant 0 : index
    %c3_46 = arith.constant 3 : index
    %c0_47 = arith.constant 0 : index
    %c0_48 = arith.constant 0 : index
    %55 = vector.load %arg3[%c0_45, %c3_46, %c0_47, %c0_48] : memref<1x4x8x128xf32, #tpu.memory_space<vmem>>, vector<1x1x8x128xf32>
    %56 = vector.shape_cast %55 : vector<1x1x8x128xf32> to vector<8x128xf32>
    %57 = arith.mulf %56, %52 : vector<8x128xf32>
    %58 = arith.addf %46, %57 : vector<8x128xf32>
    %cst_49 = arith.constant 2.992000e-01 : f32
    %59 = vector.broadcast %cst_49 : f32 to vector<8x128xf32>
    %60 = arith.mulf %56, %59 : vector<8x128xf32>
    %61 = arith.addf %49, %60 : vector<8x128xf32>
    %62 = math.log %54 : vector<8x128xf32>
    %63 = arith.subf %58, %62 : vector<8x128xf32>
    %64 = math.exp %63 : vector<8x128xf32>
    %cst_50 = arith.constant 1.000000e+00 : f32
    %65 = vector.broadcast %cst_50 : f32 to vector<8x128xf32>
    %66 = arith.subf %65, %64 : vector<8x128xf32>
    %cst_51 = arith.constant 0.000000e+00 : f32
    %67 = vector.broadcast %cst_51 : f32 to vector<8x128xf32>
    %68 = arith.subf %67, %61 : vector<8x128xf32>
    %69 = arith.mulf %68, %66 : vector<8x128xf32>
    %70 = arith.mulf %69, %66 : vector<8x128xf32>
    %71 = arith.mulf %70, %63 : vector<8x128xf32>
    %72 = vector.shape_cast %71 : vector<8x128xf32> to vector<1x8x128xf32>
    %cst_52 = arith.constant dense<0.000000e+00> : vector<8x128xf32>
    %73 = vector.multi_reduction <add>, %72, %cst_52 [0] : vector<1x8x128xf32> to vector<8x128xf32>
    %c0_53 = arith.constant 0 : index
    %c0_54 = arith.constant 0 : index
    %c0_55 = arith.constant 0 : index
    %c0_56 = arith.constant 0 : index
    %74 = vector.load %arg4[%c0_53, %c0_54, %c0_55, %c0_56] : memref<1x1x8x128xf32, #tpu.memory_space<vmem>>, vector<1x1x8x128xf32>
    %75 = vector.shape_cast %74 : vector<1x1x8x128xf32> to vector<8x128xf32>
    %76 = vector.shape_cast %73 : vector<8x128xf32> to vector<1x1x8x128xf32>
    tpu.vector_store %arg4[%c0_53, %c0_54, %c0_55, %c0_56], %76 {strides = array<i32>} : memref<1x1x8x128xf32, #tpu.memory_space<vmem>>, vector<1x1x8x128xf32>,
    return
  }
  func.func @transform_0(%arg0: i32, %arg1: i32) -> (i32, i32, i32, i32) {
    %c0_i32 = arith.constant 0 : i32
    %c0_i32_0 = arith.constant 0 : i32
    %c0_i32_1 = arith.constant 0 : i32
    return %arg0, %c0_i32, %arg1, %c0_i32_0 : i32, i32, i32, i32
  }
  func.func @transform_1(%arg0: i32, %arg1: i32) -> (i32, i32, i32, i32) {
    %c0_i32 = arith.constant 0 : i32
    %c0_i32_0 = arith.constant 0 : i32
    %c0_i32_1 = arith.constant 0 : i32
    return %arg0, %c0_i32, %arg1, %c0_i32_0 : i32, i32, i32, i32
  }
  func.func @transform_2(%arg0: i32, %arg1: i32) -> (i32, i32, i32, i32) {
    %c0_i32 = arith.constant 0 : i32
    %c0_i32_0 = arith.constant 0 : i32
    %c0_i32_1 = arith.constant 0 : i32
    return %arg0, %arg1, %c0_i32, %c0_i32_0 : i32, i32, i32, i32
  }
}

</mosaic_0001>

<llo_original>
// kernel: tpu_custom_call.1
$region0: #{tpu_custom_call.1}
  #allocation0 [shape = 'u32[]', space=smem, size = 0x4, offset = 0x4, fixed_abs, tag = 'smem constant byte address 0x4 - core index']
  #allocation1 [shape = 'u32[72,128]{1,0:T(1,128)}', space=vmem, size = 0x9000, scoped, tag = 'internal scratch']
  %s0 = inlined_call_operand.hbm [shape: f32[2,4,8,128], index: 0, kind: input, shape index: {}]
  %s1 = inlined_call_operand.hbm [shape: f32[2,4,8,128], index: 1, kind: input, shape index: {}]
  %s2 = inlined_call_operand.hbm [shape: f32[2,1,8,128], index: 2, kind: output, shape index: {}]
  %s3 = sld [smem:[#allocation0]]
  $region49: #{tpu_custom_call.1} parent=0
    _
  %s5 = ssub.s32 1, %s3
  %s6 = scalar_select 0, %s5, %s3
  $region1: #{tpu_custom_call.1} parent=0
    #allocation2 [shape = 'u8[32768]{0}', space=vmem, size = 0x8000, scoped, tag = 'input window, operand 0']
    #allocation3 [shape = 's32[2]{0}', space=sflag, size = 0x8, scoped, tag = 'scoped memory for tpu_custom_call.1']
    #allocation4 [shape = 's32[2]{0}', space=sflag, size = 0x8, scoped, tag = 'scoped memory for tpu_custom_call.1']
    #allocation5 [shape = 'u8[32768]{0}', space=vmem, size = 0x8000, scoped, tag = 'input window, operand 1']
    #allocation6 [shape = 's32[2]{0}', space=sflag, size = 0x8, scoped, tag = 'scoped memory for tpu_custom_call.1']
    #allocation7 [shape = 'u8[8192]{0}', space=vmem, size = 0x2000, scoped, tag = 'output window, operand 0']
    %7 = vsyncpa [#allocation3], 0
    %s8 = scalar_lea.sflag [#allocation3], 1
    %9 = vsyncpa %s8, 0
    %10 = vsyncpa [#allocation6], 0
    %s11 = scalar_lea.sflag [#allocation6], 1
    %12 = vsyncpa %s11, 0
    %13 = vsyncpa [#allocation4], 0
    %s14 = scalar_lea.sflag [#allocation4], 1
    %15 = vsyncpa %s14, 0
    loop: start=0, step=1, limit=4
    $region2: #{tpu_custom_call.1} parent=1 // loop_pre_header
      _
    $region3: #{tpu_custom_call.1} parent=1 // loop_header
      %s17 = sphi 0, %s21
      %p18 = scmp.ge.s32.totalorder %s17, 4
      %s24 = sphi 0, %s36
      %s25 = sphi 0, %s32
      %s26 = sphi 0, %s24
      %s27 = sphi 0, %s25
      %s28 = sphi 0, %s26
      %s29 = sphi 0, %s27
      %s41 = sphi 0, %s43
      %s44 = sphi 0, %s41
      %s45 = sphi 0, %s44
      %s61 = sphi 0, %s45
      %s69 = sphi 0, %s71
      %s72 = sphi 0, %s69
      %s73 = sphi 0, %s72
      %s89 = sphi 0, %s73
      %s97 = sphi 0, %s99
      %s100 = sphi 0, %s97
      %s101 = sphi 0, %s100
      %s117 = sphi 0, %s101
    $region4: #{tpu_custom_call.1} parent=1 // loop_header_branch
      %20 = sbr.rel (%p18) target = $region8
    $region5: #{tpu_custom_call.1} parent=1 // loop_body
      %s22 = ssub.s32 %s17, 1
      %s23 = ssub.s32 %s17, 2
      %s30 = sadd.s32 1, %s25
      %p31 = scmp.ge.s32.totalorder %s30, 1
      %s32 = scalar_select %p31, 0, %s30
      %s33 = sadd.s32 1, %s24
      %s34 = scalar_select %p31, %s33, %s24
      %p35 = scmp.ge.s32.totalorder %s34, 2
      %s36 = scalar_select %p35, 0, %s34
      %s37 = ssub.s32 %s24, %s36
      %s38 = ssub.s32 %s25, %s32
      %s39 = sor.u32 %s37, %s38
      %p40 = scmp.eq.s32.totalorder %s39, 0
      %s42 = sadd.s32 %s41, 1
      %s43 = scalar_select %p40, %s41, %s42
      %p46 = pneg %p40
      %p47 = scmp.eq.s32.totalorder %s17, 1
      %p48 = por %p46, %p47
      %p49 = scmp.ne.s32.totalorder %s41, %s44
      %p50 = scmp.eq.s32.totalorder %s17, 0
      %p51 = por %p49, %p50
      %p52 = scmp.ne.s32.totalorder %s41, %s44
      %p53 = scmp.eq.s32.totalorder %s22, 1
      %p54 = por %p52, %p53
      %p55 = scmp.ne.s32.totalorder %s44, %s45
      %p56 = scmp.eq.s32.totalorder %s22, 0
      %p57 = por %p55, %p56
      %p58 = scmp.ne.s32.totalorder %s44, %s45
      %p59 = scmp.eq.s32.totalorder %s23, 1
      %p60 = por %p58, %p59
      %p62 = scmp.ne.s32.totalorder %s45, %s61
      %p63 = scmp.eq.s32.totalorder %s23, 0
      %p64 = por %p62, %p63
      %s65 = ssub.s32 %s24, %s36
      %s66 = ssub.s32 %s25, %s32
      %s67 = sor.u32 %s65, %s66
      %p68 = scmp.eq.s32.totalorder %s67, 0
      %s70 = sadd.s32 %s69, 1
      %s71 = scalar_select %p68, %s69, %s70
      %p74 = pneg %p68
      %p75 = scmp.eq.s32.totalorder %s17, 1
      %p76 = por %p74, %p75
      %p77 = scmp.ne.s32.totalorder %s69, %s72
      %p78 = scmp.eq.s32.totalorder %s17, 0
      %p79 = por %p77, %p78
      %p80 = scmp.ne.s32.totalorder %s69, %s72
      %p81 = scmp.eq.s32.totalorder %s22, 1
      %p82 = por %p80, %p81
      %p83 = scmp.ne.s32.totalorder %s72, %s73
      %p84 = scmp.eq.s32.totalorder %s22, 0
      %p85 = por %p83, %p84
      %p86 = scmp.ne.s32.totalorder %s72, %s73
      %p87 = scmp.eq.s32.totalorder %s23, 1
      %p88 = por %p86, %p87
      %p90 = scmp.ne.s32.totalorder %s73, %s89
      %p91 = scmp.eq.s32.totalorder %s23, 0
      %p92 = por %p90, %p91
      %s93 = ssub.s32 %s24, %s36
      %s94 = ssub.s32 %s25, %s32
      %s95 = sor.u32 %s93, %s94
      %p96 = scmp.eq.s32.totalorder %s95, 0
      %s98 = sadd.s32 %s97, 1
      %s99 = scalar_select %p96, %s97, %s98
      %p102 = pneg %p96
      %p103 = scmp.eq.s32.totalorder %s17, 1
      %p104 = por %p102, %p103
      %p105 = scmp.ne.s32.totalorder %s97, %s100
      %p106 = scmp.eq.s32.totalorder %s17, 0
      %p107 = por %p105, %p106
      %p108 = scmp.ne.s32.totalorder %s97, %s100
      %p109 = scmp.eq.s32.totalorder %s22, 1
      %p110 = por %p108, %p109
      %p111 = scmp.ne.s32.totalorder %s100, %s101
      %p112 = scmp.eq.s32.totalorder %s22, 0
      %p113 = por %p111, %p112
      %p114 = scmp.ne.s32.totalorder %s100, %s101
      %p115 = scmp.eq.s32.totalorder %s23, 1
      %p116 = por %p114, %p115
      %p118 = scmp.ne.s32.totalorder %s101, %s117
      %p119 = scmp.eq.s32.totalorder %s23, 0
      %p120 = por %p118, %p119
      %p121 = scmp.le.s32.totalorder 1, %s17
      %p122 = scmp.lt.s32.totalorder %s17, 3
      %p123 = pnand %p121, %p122
      %p124 = pneg %p123
      // Predicated region
      $region9: #{tpu_custom_call.1} parent=5 // pred_check
        _
      $region10: #{tpu_custom_call.1} parent=5 // pred_check_branch
        %126 = sbr.rel (%p123) target = $region12
      $region11: #{tpu_custom_call.1} parent=5 // pred_region
        %s127 = ssub.s32 %s17, 1
      $region12: #{tpu_custom_call.1} parent=5 // pred_fallthru
        _
      %p128 = scmp.lt.s32.totalorder %s17, 2
      // Predicated region
      $region13: #{tpu_custom_call.1} parent=5 // pred_check
        %p129 = pneg %p128
      $region14: #{tpu_custom_call.1} parent=5 // pred_check_branch
        %131 = sbr.rel (%p129) target = $region16
      $region15: #{tpu_custom_call.1} parent=5 // pred_region
        // Predicated region
        $region17: #{tpu_custom_call.1} parent=15 // pred_check
          %p132 = pneg %p51
        $region18: #{tpu_custom_call.1} parent=15 // pred_check_branch
          %134 = sbr.rel (%p132) target = $region20
        $region19: #{tpu_custom_call.1} parent=15 // pred_region
          %s135 = sand.u32 %s41, 1
          %s136 = scalar_lea.sflag [#allocation3], %s135
          %s137 = sand.u32 %s41, 1
          %s138 = smul.addr %s137, 32
          %s139 = scalar_lea.vmem [#allocation2], %s138
          %141 = vsyncadd %s136, 0
          %s142 = smul.addr %s24, 4
          %s143 = sadd.s32 %s25, %s142
          %s144 = smul.addr %s143, 8
          %s145 = scalar_lea.hbm %s0, %s144
          %s146 = sshll.u32 %s145, 4
          %s147 = int_to_ptr.hbm [resolvable:$true] %s146
          %s148 = sshll.u32 %s139, 4
          %s149 = int_to_ptr.vmem [resolvable:$true] %s148
          %154 = dma.hbm_to_vmem [thread:$0]  %s147, 512, %s149, %s136, 128, 128, 8
        $region20: #{tpu_custom_call.1} parent=15 // pred_fallthru
          _
        // Predicated region
        $region21: #{tpu_custom_call.1} parent=15 // pred_check
          %p155 = pneg %p79
        $region22: #{tpu_custom_call.1} parent=15 // pred_check_branch
          %157 = sbr.rel (%p155) target = $region24
        $region23: #{tpu_custom_call.1} parent=15 // pred_region
          %s158 = sand.u32 %s69, 1
          %s159 = scalar_lea.sflag [#allocation6], %s158
          %s160 = sand.u32 %s69, 1
          %s161 = smul.addr %s160, 32
          %s162 = scalar_lea.vmem [#allocation5], %s161
          %164 = vsyncadd %s159, 0
          %s165 = smul.addr %s24, 4
          %s166 = sadd.s32 %s25, %s165
          %s167 = smul.addr %s166, 8
          %s168 = scalar_lea.hbm %s1, %s167
          %s169 = sshll.u32 %s168, 4
          %s170 = int_to_ptr.hbm [resolvable:$true] %s169
          %s171 = sshll.u32 %s162, 4
          %s172 = int_to_ptr.vmem [resolvable:$true] %s171
          %177 = dma.hbm_to_vmem [thread:$0]  %s170, 512, %s172, %s159, 128, 128, 8
        $region24: #{tpu_custom_call.1} parent=15 // pred_fallthru
          _
      $region16: #{tpu_custom_call.1} parent=5 // pred_fallthru
        _
      %p178 = scmp.le.s32.totalorder 1, %s17
      %p179 = scmp.lt.s32.totalorder %s17, 3
      %p180 = pnand %p178, %p179
      %p181 = pneg %p180
      // Predicated region
      $region25: #{tpu_custom_call.1} parent=5 // pred_check
        _
      $region26: #{tpu_custom_call.1} parent=5 // pred_check_branch
        %183 = sbr.rel (%p180) target = $region28
      $region27: #{tpu_custom_call.1} parent=5 // pred_region
        %s184 = ssub.s32 %s17, 1
        %s185 = sand.u32 %s44, 1
        %s186 = scalar_lea.sflag [#allocation3], %s185
        %s187 = sand.u32 %s44, 1
        %s188 = smul.addr %s187, 32
        %s189 = scalar_lea.vmem [#allocation2], %s188
        // Predicated region
        $region29: #{tpu_custom_call.1} parent=27 // pred_check
          %p190 = pneg %p57
        $region30: #{tpu_custom_call.1} parent=27 // pred_check_branch
          %192 = sbr.rel (%p190) target = $region32
        $region31: #{tpu_custom_call.1} parent=27 // pred_region
          %194 = dma.done %s186, 512
        $region32: #{tpu_custom_call.1} parent=27 // pred_fallthru
          _
        %s195 = sand.u32 %s72, 1
        %s196 = scalar_lea.sflag [#allocation6], %s195
        %s197 = sand.u32 %s72, 1
        %s198 = smul.addr %s197, 32
        %s199 = scalar_lea.vmem [#allocation5], %s198
        // Predicated region
        $region33: #{tpu_custom_call.1} parent=27 // pred_check
          %p200 = pneg %p85
        $region34: #{tpu_custom_call.1} parent=27 // pred_check_branch
          %202 = sbr.rel (%p200) target = $region36
        $region35: #{tpu_custom_call.1} parent=27 // pred_region
          %204 = dma.done %s196, 512
        $region36: #{tpu_custom_call.1} parent=27 // pred_fallthru
          _
        %s205 = sand.u32 %s44, 1
        %s206 = scalar_lea.sflag [#allocation3], %s205
        %s207 = sand.u32 %s44, 1
        %s208 = smul.addr %s207, 32
        %s209 = scalar_lea.vmem [#allocation2], %s208
        %p210 = pneg %p57
        %p211 = pneg %p54
        %s212 = sand.u32 %s72, 1
        %s213 = scalar_lea.sflag [#allocation6], %s212
        %s214 = sand.u32 %s72, 1
        %s215 = smul.addr %s214, 32
        %s216 = scalar_lea.vmem [#allocation5], %s215
        %p217 = pneg %p85
        %p218 = pneg %p82
        %p219 = pneg %p113
        %p220 = pneg %p110
        %s221 = sand.u32 %s100, 1
        %s222 = scalar_lea.sflag [#allocation4], %s221
        %s223 = sand.u32 %s100, 1
        %s224 = smul.addr %s223, 8
        %s225 = scalar_lea.vmem [#allocation7], %s224
        %v226 = vld [vmem:[%s189] sm:$0xff]
        %s227 = scalar_lea.vmem %s189, 8 [#allocation2]
        %v228 = vld [vmem:[%s227] sm:$0xff]
        %v229 = vmax.f32 %v226, %v228
        %s230 = scalar_lea.vmem %s189, 16 [#allocation2]
        %v231 = vld [vmem:[%s230] sm:$0xff]
        %v232 = vmax.f32 %v229, %v231
        %s233 = scalar_lea.vmem %s189, 24 [#allocation2]
        %v234 = vld [vmem:[%s233] sm:$0xff]
        %v235 = vmax.f32 %v232, %v234
        %v236 = vsub.f32 %v226, %v235
        %v237 = vmul.f32 %v236, 1.442695
        %v238 = vpow.pop %v237
        %v239 = vadd.f32 %v238, 0.0
        %v240 = vld [vmem:[%s199] sm:$0xff]
        %v241 = vmul.f32 %v240, %v236
        %v242 = vadd.f32 %v241, 0.0
        %v243 = vmul.f32 %v240, 0.145
        %v244 = vadd.f32 %v243, 0.0
        %v245 = vsub.f32 %v228, %v235
        %v246 = vmul.f32 %v245, 1.442695
        %v247 = vpow.pop %v246
        %v248 = vadd.f32 %v239, %v247
        %s249 = scalar_lea.vmem %s199, 8 [#allocation5]
        %v250 = vld [vmem:[%s249] sm:$0xff]
        %v251 = vmul.f32 %v250, %v245
        %v252 = vadd.f32 %v242, %v251
        %v253 = vmul.f32 %v250, 0.1796
        %v254 = vadd.f32 %v244, %v253
        %v255 = vsub.f32 %v231, %v235
        %v256 = vmul.f32 %v255, 1.442695
        %v257 = vpow.pop %v256
        %v258 = vadd.f32 %v248, %v257
        %s259 = scalar_lea.vmem %s199, 16 [#allocation5]
        %v260 = vld [vmem:[%s259] sm:$0xff]
        %v261 = vmul.f32 %v260, %v255
        %v262 = vadd.f32 %v252, %v261
        %v263 = vmul.f32 %v260, 0.3762
        %v264 = vadd.f32 %v254, %v263
        %v265 = vsub.f32 %v234, %v235
        %v266 = vmul.f32 %v265, 1.442695
        %v267 = vpow.pop %v266
        %v268 = vadd.f32 %v258, %v267
        %s269 = scalar_lea.vmem %s199, 24 [#allocation5]
        %v270 = vld [vmem:[%s269] sm:$0xff]
        %v271 = vmul.f32 %v270, %v265
        %v272 = vadd.f32 %v262, %v271
        %v273 = vmul.f32 %v270, 0.2992
        %v274 = vadd.f32 %v264, %v273
        %v275 = vlog2.pop %v268
        %v276 = vmul.f32 %v275, 0.6931472
        %v277 = vsub.f32 %v272, %v276
        %v278 = vmul.f32 %v277, 1.442695
        %v279 = vpow.pop %v278
        %v280 = vsub.f32 1.0, %v279
        %v281 = vsub.f32 0.0, %v274
        %v282 = vmul.f32 %v281, %v280
        %v283 = vmul.f32 %v282, %v280
        %v284 = vmul.f32 %v283, %v277
        %v285 = vadd.f32 %v284, 0.0
        %286 = vst [vmem:[%s225] sm:$0xff] %v285
        %s287 = sand.u32 %s100, 1
        %s288 = scalar_lea.sflag [#allocation4], %s287
        %s289 = sand.u32 %s100, 1
        %s290 = smul.addr %s289, 8
        %s291 = scalar_lea.vmem [#allocation7], %s290
        // Predicated region
        $region37: #{tpu_custom_call.1} parent=27 // pred_check
          %p292 = pneg %p110
        $region38: #{tpu_custom_call.1} parent=27 // pred_check_branch
          %294 = sbr.rel (%p292) target = $region40
        $region39: #{tpu_custom_call.1} parent=27 // pred_region
          %296 = vsyncadd %s288, 0
          %s297 = sadd.s32 %s27, %s26
          %s298 = smul.addr %s297, 8
          %s299 = scalar_lea.hbm %s2, %s298
          %s301 = sshll.u32 %s291, 4
          %s302 = int_to_ptr.vmem [resolvable:$true] %s301
          %s303 = sshll.u32 %s299, 4
          %s304 = int_to_ptr.hbm [resolvable:$true] %s303
          %306 = dma.vmem_to_hbm [thread:$0]  %s302, 128, %s304, %s288
        $region40: #{tpu_custom_call.1} parent=27 // pred_fallthru
          _
      $region28: #{tpu_custom_call.1} parent=5 // pred_fallthru
        _
      %p307 = scmp.le.s32.totalorder 2, %s17
      // Predicated region
      $region41: #{tpu_custom_call.1} parent=5 // pred_check
        %p308 = pneg %p307
      $region42: #{tpu_custom_call.1} parent=5 // pred_check_branch
        %310 = sbr.rel (%p308) target = $region44
      $region43: #{tpu_custom_call.1} parent=5 // pred_region
        %s311 = ssub.s32 %s17, 2
        // Predicated region
        $region45: #{tpu_custom_call.1} parent=43 // pred_check
          %p312 = pneg %p116
        $region46: #{tpu_custom_call.1} parent=43 // pred_check_branch
          %314 = sbr.rel (%p312) target = $region48
        $region47: #{tpu_custom_call.1} parent=43 // pred_region
          %s315 = sand.u32 %s101, 1
          %s316 = scalar_lea.sflag [#allocation4], %s315
          %s317 = sand.u32 %s101, 1
          %s318 = smul.addr %s317, 8
          %s319 = scalar_lea.vmem [#allocation7], %s318
          %321 = dma.done %s316, 128
        $region48: #{tpu_custom_call.1} parent=43 // pred_fallthru
          _
      $region44: #{tpu_custom_call.1} parent=5 // pred_fallthru
        _
    $region6: #{tpu_custom_call.1} parent=1 // loop_footer
      %s21 = sadd.s32 1, %s17
    $region7: #{tpu_custom_call.1} parent=1 // loop_footer_branch
      %16 = sbr.rel target = $region3
    $region8: #{tpu_custom_call.1} parent=1 // loop_exit
      _
    %322 = vsyncpa [#allocation3], 1
    %s323 = scalar_lea.sflag [#allocation3], 1
    %324 = vsyncpa %s323, 1
    %325 = vsyncpa [#allocation6], 1
    %s326 = scalar_lea.sflag [#allocation6], 1
    %327 = vsyncpa %s326, 1
    %328 = vsyncpa [#allocation4], 1
    %s329 = scalar_lea.sflag [#allocation4], 1
    %330 = vsyncpa %s329, 1

</llo_original>
